<compile_context>
chip_gen: v7x
topology: tpu7x:2x2x1
jax: 0.10.0
libtpu: 0.0.40
codegen_flags: <defaults>
</compile_context>

<pallas_src>
import functools

import jax
import jax.numpy as jnp
from jax import lax
from jax.experimental import pallas as pl
from jax.experimental.pallas import tpu as pltpu

_LANES = 128
_SUBLANES = 8


def _round_up(x, m):
    return ((x + m - 1) // m) * m


def _mse_kernel(p_ref, t_ref, o_ref, acc_ref, *, steps_per_core, tile_rows,
                acc_rows, num_chunks, valid_rows, need_mask):
    p_idx = pl.program_id(0)          # parallel (megacore) axis
    k = pl.program_id(1)              # serial reduction axis

    @pl.when(k == 0)
    def _():
        acc_ref[...] = jnp.zeros_like(acc_ref)

    if need_mask:
        # Global (unclamped) row offset of this tile; rows >= valid_rows are
        # either undefined edge-block data or phantom (clamped) tiles and must
        # contribute zero.
        base = (p_idx * steps_per_core + k) * tile_rows
        row_iota = lax.broadcasted_iota(jnp.int32, (acc_rows, _LANES), 0)

    def body(j, acc):
        start = pl.multiple_of(j * acc_rows, acc_rows)
        d = (p_ref[pl.ds(start, acc_rows), :].astype(jnp.float32)
             - t_ref[pl.ds(start, acc_rows), :].astype(jnp.float32))
        sq = d * d
        if need_mask:
            rows_here = base + start + row_iota
            sq = jnp.where(rows_here < valid_rows, sq, 0.0)
        return acc + sq

    partial = lax.fori_loop(
        0, num_chunks, body,
        jnp.zeros((acc_rows, _LANES), jnp.float32),
        unroll=min(8, num_chunks),
    )
    acc_ref[...] += partial

    @pl.when(k == pl.num_programs(1) - 1)
    def _():
        # Single cross-lane/sublane reduce, exactly once per shard.
        o_ref[0, 0] = jnp.sum(acc_ref[...])


def pose_loss(predicted_state, true_state, *, tile_rows=8192,
              min_kernel_elems=128 * 1024, parallel_shards=2):
    """MSE(pred, true) with reduction='mean', exactly like nn.MSELoss()."""
    assert predicted_state.shape == true_state.shape, "shape mismatch"
    n = predicted_state.size
    assert n > 0, "empty input"

    # Tiny inputs: fixed pallas_call / DMA overhead dominates; plain XLA wins.
    if n < min_kernel_elems:
        d = predicted_state.astype(jnp.float32) - true_state.astype(jnp.float32)
        return jnp.mean(d * d)

    p = predicted_state.reshape(-1)
    t = true_state.reshape(-1)

    # Lane pad only when the flat size is ragged w.r.t. 128 lanes.  Pad to a
    # full (8 x 128) boundary so the 2-D view is sublane-aligned; padded zeros
    # contribute 0 to the sum and the divide uses the true element count.
    # (This is the only case that still copies the inputs; lane-aligned inputs
    # stream straight from their original buffers.)
    if n % _LANES:
        padded_len = _round_up(n, _SUBLANES * _LANES)
        p = jnp.pad(p, (0, padded_len - n))
        t = jnp.pad(t, (0, padded_len - n))
    else:
        padded_len = n

    rows = padded_len // _LANES
    p = p.reshape(rows, _LANES)
    t = t.reshape(rows, _LANES)

    # Accumulator width / tile size (multiples of each other, sublane-aligned).
    acc_rows = min(64, _round_up(rows, _SUBLANES))
    tile_rows = max(acc_rows,
                    min(_round_up(tile_rows, acc_rows),
                        _round_up(rows, acc_rows)))
    num_chunks = tile_rows // acc_rows

    total_tiles = pl.cdiv(rows, tile_rows)
    last_tile = total_tiles - 1

    # Megacore split (v7x has 2 TCs; harmless on 1-TC chips).
    num_shards = parallel_shards if total_tiles >= 2 else 1
    steps_per_core = pl.cdiv(total_tiles, num_shards)

    # Mask rows that fall outside the real array (partial edge tile and/or
    # phantom tiles created by the even megacore split).
    need_mask = (num_shards * steps_per_core * tile_rows) != rows

    def in_map(pi, ki):
        # Clamp so phantom steps re-read the last valid tile (stays in bounds);
        # their contribution is zeroed by the in-kernel row mask.
        return (jnp.minimum(pi * steps_per_core + ki, last_tile), 0)

    kernel = functools.partial(
        _mse_kernel,
        steps_per_core=steps_per_core,
        tile_rows=tile_rows,
        acc_rows=acc_rows,
        num_chunks=num_chunks,
        valid_rows=rows,
        need_mask=need_mask,
    )

    block_bytes = tile_rows * _LANES * (p.dtype.itemsize + t.dtype.itemsize)
    vmem_needed = 2 * block_bytes + acc_rows * _LANES * 4   # double-buffered
    vmem_limit = min(max(32 << 20, vmem_needed + (4 << 20)), 64 << 20)

    partials = pl.pallas_call(
        kernel,
        out_shape=jax.ShapeDtypeStruct((num_shards, 1), jnp.float32),
        grid_spec=pltpu.PrefetchScalarGridSpec(
            num_scalar_prefetch=0,
            grid=(num_shards, steps_per_core),
            in_specs=[
                pl.BlockSpec((tile_rows, _LANES), in_map),
                pl.BlockSpec((tile_rows, _LANES), in_map),
            ],
            out_specs=pl.BlockSpec(
                (1, 1), lambda pi, ki: (pi, 0), memory_space=pltpu.SMEM
            ),
            scratch_shapes=[pltpu.VMEM((acc_rows, _LANES), jnp.float32)],
        ),
        compiler_params=pltpu.CompilerParams(
            dimension_semantics=("parallel", "arbitrary"),
            vmem_limit_bytes=int(vmem_limit),
        ),
    )(p, t)

    return jnp.sum(partials) / jnp.float32(n)


if __name__ == "__main__":
    key = jax.random.PRNGKey(0)
    ks = jax.random.split(key, 8)

    # 1) Small state-like batch, forced through the kernel path.
    shape1 = (2, 4, 16, 16)
    p1 = jax.random.normal(ks[0], shape1, dtype=jnp.float32)
    t1 = jax.random.normal(ks[1], shape1, dtype=jnp.float32)
    l1 = jax.block_until_ready(pose_loss(p1, t1, min_kernel_elems=0))
    r1 = jnp.mean((p1 - t1) ** 2)
    assert jnp.allclose(l1, r1, rtol=1e-5, atol=1e-6), (l1, r1)

    # 2) Lane-aligned but tile-ragged input: exercises the megacore split
    #    (odd tile count -> clamped phantom tile) and the in-kernel row mask.
    shape2 = (4, 4, 96, 100)            # 153600 elems -> 1200 rows
    p2 = jax.random.normal(ks[2], shape2, dtype=jnp.float32)
    t2 = jax.random.normal(ks[3], shape2, dtype=jnp.float32)
    l2 = jax.block_until_ready(pose_loss(p2, t2, tile_rows=256))
    r2 = jnp.mean((p2 - t2) ** 2)
    assert jnp.allclose(l2, r2, rtol=1e-5, atol=1e-6), (l2, r2)

    # 3) Ragged flat size (not a multiple of 128), forced kernel path:
    #    lane pad + masked edge block.
    shape3 = (3, 5, 7, 13)
    p3 = jax.random.normal(ks[4], shape3, dtype=jnp.float32)
    t3 = jax.random.normal(ks[5], shape3, dtype=jnp.float32)
    l3 = jax.block_until_ready(pose_loss(p3, t3, min_kernel_elems=0))
    r3 = jnp.mean((p3 - t3) ** 2)
    assert jnp.allclose(l3, r3, rtol=1e-5, atol=1e-6), (l3, r3)

    # 4) Tiny-input fast path (kernel bypass).
    shape4 = (3, 5, 7)
    p4 = jax.random.normal(ks[6], shape4, dtype=jnp.float32)
    t4 = jax.random.normal(ks[7], shape4, dtype=jnp.float32)
    l4 = jax.block_until_ready(pose_loss(p4, t4))
    r4 = jnp.mean((p4 - t4) ** 2)
    assert jnp.allclose(l4, r4, rtol=1e-5, atol=1e-6), (l4, r4)

    print("KERNEL_OK")
</pallas_src>

<mosaic_0001>
module attributes {stable_mosaic.version = 11 : i64} {
  func.func @_mse_kernel(%arg0: i32, %arg1: i32, %arg2: memref<16x128xf32, #tpu.memory_space<vmem>>, %arg3: memref<16x128xf32, #tpu.memory_space<vmem>>, %arg4: memref<1x1xf32, #tpu.memory_space<smem>>, %arg5: memref<16x128xf32, #tpu.memory_space<vmem>>) attributes {dimension_semantics = [#tpu.dimension_semantics<parallel>, #tpu.dimension_semantics<arbitrary>], iteration_bounds = array<i64: 1, 1>, scalar_prefetch = 0 : i64, scratch_operands = 1 : i64, tpu.core_type = #tpu.core_type<tc>, window_params = [{transform_indices = @transform_0, window_bounds = array<i64: 16, 128>}, {transform_indices = @transform_1, window_bounds = array<i64: 16, 128>}, {transform_indices = @transform_2, window_bounds = array<i64: 1, 1>}]} {
    %c0_i32 = arith.constant 0 : i32
    %0 = arith.cmpi eq, %arg1, %c0_i32 : i32
    %1 = arith.extui %0 : i1 to i32
    %c0_i32_0 = arith.constant 0 : i32
    %2 = arith.cmpi ne, %1, %c0_i32_0 : i32
    scf.if %2 {
      %cst_9 = arith.constant 0.000000e+00 : f32
      %19 = vector.broadcast %cst_9 : f32 to vector<16x128xf32>
      %c0_10 = arith.constant 0 : index
      %c0_11 = arith.constant 0 : index
      %20 = vector.load %arg5[%c0_10, %c0_11] : memref<16x128xf32, #tpu.memory_space<vmem>>, vector<16x128xf32>
      tpu.vector_store %arg5[%c0_10, %c0_11], %19 {strides = array<i32>} : memref<16x128xf32, #tpu.memory_space<vmem>>, vector<16x128xf32>,
    } else {
    }
    %cst = arith.constant 0.000000e+00 : f32
    %3 = vector.broadcast %cst : f32 to vector<16x128xf32>
    %c0_i32_1 = arith.constant 0 : i32
    %c16_i32 = arith.constant 16 : i32
    %4 = arith.muli %c0_i32_1, %c16_i32 : i32
    %5 = tpu.assume_multiple %4, 16 : i32
    %6 = arith.index_cast %5 : i32 to index
    %c0 = arith.constant 0 : index
    %7 = vector.load %arg2[%6, %c0] : memref<16x128xf32, #tpu.memory_space<vmem>>, vector<16x128xf32>
    %8 = arith.index_cast %5 : i32 to index
    %c0_2 = arith.constant 0 : index
    %9 = vector.load %arg3[%8, %c0_2] : memref<16x128xf32, #tpu.memory_space<vmem>>, vector<16x128xf32>
    %10 = arith.subf %7, %9 : vector<16x128xf32>
    %11 = arith.mulf %10, %10 : vector<16x128xf32>
    %12 = arith.addf %3, %11 : vector<16x128xf32>
    %c1_i32 = arith.constant 1 : i32
    %c0_3 = arith.constant 0 : index
    %c0_4 = arith.constant 0 : index
    %13 = vector.load %arg5[%c0_3, %c0_4] : memref<16x128xf32, #tpu.memory_space<vmem>>, vector<16x128xf32>
    %14 = arith.addf %13, %12 : vector<16x128xf32>
    %c0_5 = arith.constant 0 : index
    %c0_6 = arith.constant 0 : index
    %15 = vector.load %arg5[%c0_5, %c0_6] : memref<16x128xf32, #tpu.memory_space<vmem>>, vector<16x128xf32>
    tpu.vector_store %arg5[%c0_5, %c0_6], %14 {strides = array<i32>} : memref<16x128xf32, #tpu.memory_space<vmem>>, vector<16x128xf32>,
    %c0_i32_7 = arith.constant 0 : i32
    %16 = arith.cmpi eq, %arg1, %c0_i32_7 : i32
    %17 = arith.extui %16 : i1 to i32
    %c0_i32_8 = arith.constant 0 : i32
    %18 = arith.cmpi ne, %17, %c0_i32_8 : i32
    scf.if %18 {
      %c0_9 = arith.constant 0 : index
      %c0_10 = arith.constant 0 : index
      %19 = vector.load %arg5[%c0_9, %c0_10] : memref<16x128xf32, #tpu.memory_space<vmem>>, vector<16x128xf32>
      %20 = vector.shape_cast %19 : vector<16x128xf32> to vector<1x16x128xf32>
      %cst_11 = arith.constant dense<0.000000e+00> : vector<1xf32>
      %21 = vector.multi_reduction <add>, %20, %cst_11 [1, 2] : vector<1x16x128xf32> to vector<1xf32>
      %22 = vector.shape_cast %21 : vector<1xf32> to vector<1x1x1xf32>
      %23 = vector.extract %22[0, 0, 0] : f32 from vector<1x1x1xf32>
      %c0_12 = arith.constant 0 : index
      %c0_13 = arith.constant 0 : index
      %24 = memref.load %arg4[%c0_12, %c0_13] : memref<1x1xf32, #tpu.memory_space<smem>>
      memref.store %23, %arg4[%c0_12, %c0_13] : memref<1x1xf32, #tpu.memory_space<smem>>
    } else {
    }
    return
  }
  func.func @transform_0(%arg0: i32, %arg1: i32) -> (i32, i32) {
    %c1_i32 = arith.constant 1 : i32
    %0 = arith.muli %arg0, %c1_i32 : i32
    %1 = arith.addi %0, %arg1 : i32
    %c0_i32 = arith.constant 0 : i32
    %2 = arith.minsi %1, %c0_i32 : i32
    %c0_i32_0 = arith.constant 0 : i32
    %c0_i32_1 = arith.constant 0 : i32
    return %2, %c0_i32_0 : i32, i32
  }
  func.func @transform_1(%arg0: i32, %arg1: i32) -> (i32, i32) {
    %c1_i32 = arith.constant 1 : i32
    %0 = arith.muli %arg0, %c1_i32 : i32
    %1 = arith.addi %0, %arg1 : i32
    %c0_i32 = arith.constant 0 : i32
    %2 = arith.minsi %1, %c0_i32 : i32
    %c0_i32_0 = arith.constant 0 : i32
    %c0_i32_1 = arith.constant 0 : i32
    return %2, %c0_i32_0 : i32, i32
  }
  func.func @transform_2(%arg0: i32, %arg1: i32) -> (i32, i32) {
    %c0_i32 = arith.constant 0 : i32
    %c0_i32_0 = arith.constant 0 : i32
    return %arg0, %c0_i32 : i32, i32
  }
}

</mosaic_0001>

<llo_original>
// kernel: tpu_custom_call.1
$region0: #{tpu_custom_call.1}
  #allocation0 [shape = 'u32[]', space=smem, size = 0x4, offset = 0x4, fixed_abs, tag = 'smem constant byte address 0x4 - core index']
  #allocation1 [shape = 'u32[144,128]{1,0:T(1,128)}', space=vmem, size = 0x12000, scoped, tag = 'internal scratch']
  #allocation2 [shape = 'f32[16,128]{1,0:T(8,128)}', space=vmem, size = 0x2000, scoped, tag = 'scratch operand']
  %s0 = inlined_call_operand.hbm [shape: f32[16,128], index: 0, kind: input, shape index: {}]
  %s1 = inlined_call_operand.hbm [shape: f32[16,128], index: 1, kind: input, shape index: {}]
  %s2 = inlined_call_operand.hbm [shape: f32[1,1], index: 2, kind: output, shape index: {}]
  %s3 = sld [smem:[#allocation0]]
  $region34: #{tpu_custom_call.1} parent=0
    _
  %s5 = ssub.s32 1, %s3
  %s6 = scalar_select 0, %s5, %s3
  $region1: #{tpu_custom_call.1} parent=0
    #allocation3 [shape = 'u8[8192]{0}', space=vmem, size = 0x2000, scoped, tag = 'input window, operand 0, single buffered']
    #allocation4 [shape = 's32[1]{0}', space=sflag, size = 0x4, scoped, tag = 'scoped memory for tpu_custom_call.1']
    #allocation5 [shape = 's32[1]{0}', space=sflag, size = 0x4, scoped, tag = 'scoped memory for tpu_custom_call.1']
    #allocation6 [shape = 'u8[8192]{0}', space=vmem, size = 0x2000, scoped, tag = 'input window, operand 1, single buffered']
    #allocation7 [shape = 's32[1]{0}', space=sflag, size = 0x4, scoped, tag = 'scoped memory for tpu_custom_call.1']
    #allocation8 [shape = 'u8[512]{0}', space=smem, size = 0x200, scoped, tag = 'output window, operand 0, single buffered']
    %7 = vsyncpa [#allocation4], 0
    %8 = vsyncpa [#allocation7], 0
    %9 = vsyncpa [#allocation5], 0
    // Predicated region
    $region2: #{tpu_custom_call.1} parent=1 // pred_check
      _
    $region3: #{tpu_custom_call.1} parent=1 // pred_check_branch
      %11 = sbr.rel (0) target = $region5
    $region4: #{tpu_custom_call.1} parent=1 // pred_region
      %s12 = sadd.s32 0, 0
      %p13 = scmp.lt.s32.totalorder %s12, 0
      %s14 = scalar_select %p13, %s12, 0
      %s15 = smul.u32 2, %s14
      %s17 = ssub.s32 256, 256
      %18 = vsyncadd [#allocation4], %s17
      %s19 = smul.addr %s15, 128
      %s20 = scalar_lea.hbm %s0, %s19
      %s21 = sshll.u32 [#allocation3], 4
      %s22 = int_to_ptr.vmem [resolvable:$true] %s21
      %27 = dma.hbm_to_vmem [thread:$0]  %s20, 256, %s22, [#allocation4], 128, 128, 8
    $region5: #{tpu_custom_call.1} parent=1 // pred_fallthru
      _
    // Predicated region
    $region6: #{tpu_custom_call.1} parent=1 // pred_check
      _
    $region7: #{tpu_custom_call.1} parent=1 // pred_check_branch
      %29 = sbr.rel (0) target = $region9
    $region8: #{tpu_custom_call.1} parent=1 // pred_region
      %s30 = sadd.s32 0, 0
      %p31 = scmp.lt.s32.totalorder %s30, 0
      %s32 = scalar_select %p31, %s30, 0
      %s33 = smul.u32 2, %s32
      %s35 = ssub.s32 256, 256
      %36 = vsyncadd [#allocation7], %s35
      %s37 = smul.addr %s33, 128
      %s38 = scalar_lea.hbm %s1, %s37
      %s39 = sshll.u32 [#allocation6], 4
      %s40 = int_to_ptr.vmem [resolvable:$true] %s39
      %45 = dma.hbm_to_vmem [thread:$0]  %s38, 256, %s40, [#allocation7], 128, 128, 8
    $region9: #{tpu_custom_call.1} parent=1 // pred_fallthru
      _
    // Predicated region
    $region10: #{tpu_custom_call.1} parent=1 // pred_check
      _
    $region11: #{tpu_custom_call.1} parent=1 // pred_check_branch
      %47 = sbr.rel (0) target = $region13
    $region12: #{tpu_custom_call.1} parent=1 // pred_region
      %48 = dma.done [#allocation4], 256
    $region13: #{tpu_custom_call.1} parent=1 // pred_fallthru
      _
    // Predicated region
    $region14: #{tpu_custom_call.1} parent=1 // pred_check
      _
    $region15: #{tpu_custom_call.1} parent=1 // pred_check_branch
      %50 = sbr.rel (0) target = $region17
    $region16: #{tpu_custom_call.1} parent=1 // pred_region
      %51 = dma.done [#allocation7], 256
    $region17: #{tpu_custom_call.1} parent=1 // pred_fallthru
      _
    %s52 = sadd.s32 0, 0
    %p53 = scmp.lt.s32.totalorder %s52, 0
    %s54 = scalar_select %p53, %s52, 0
    %s55 = smul.u32 2, %s54
    %s56 = sadd.s32 0, 0
    %p57 = scmp.lt.s32.totalorder %s56, 0
    %s58 = scalar_select %p57, %s56, 0
    %s59 = smul.u32 2, %s58
    %p60 = scmp.eq.s32.totalorder 0, 0
    // Predicated region
    $region18: #{tpu_custom_call.1} parent=1 // pred_check
      %p61 = pneg %p60
    $region19: #{tpu_custom_call.1} parent=1 // pred_check_branch
      %63 = sbr.rel (%p61) target = $region21
    $region20: #{tpu_custom_call.1} parent=1 // pred_region
      %64 = vst [vmem:[#allocation2] sm:$0xff] 0.0
      %65 = vst [vmem:[#allocation2 + $0x8] sm:$0xff] 0.0
    $region21: #{tpu_custom_call.1} parent=1 // pred_fallthru
      _
    %v66 = vld [vmem:[#allocation3] sm:$0xff]
    %v67 = vld [vmem:[#allocation3 + $0x8] sm:$0xff]
    %v68 = vld [vmem:[#allocation6] sm:$0xff]
    %v69 = vld [vmem:[#allocation6 + $0x8] sm:$0xff]
    %v70 = vsub.f32 %v66, %v68
    %v71 = vsub.f32 %v67, %v69
    %v72 = vmul.f32 %v70, %v70
    %v73 = vmul.f32 %v71, %v71
    %v74 = vadd.f32 %v72, 0.0
    %v75 = vadd.f32 %v73, 0.0
    %v76 = vld [vmem:[#allocation2] sm:$0xff]
    %v77 = vld [vmem:[#allocation2 + $0x8] sm:$0xff]
    %v78 = vadd.f32 %v76, %v74
    %v79 = vadd.f32 %v77, %v75
    %80 = vst [vmem:[#allocation2] sm:$0xff] %v78
    %81 = vst [vmem:[#allocation2 + $0x8] sm:$0xff] %v79
    // Predicated region
    $region22: #{tpu_custom_call.1} parent=1 // pred_check
      %p82 = pneg %p60
    $region23: #{tpu_custom_call.1} parent=1 // pred_check_branch
      %84 = sbr.rel (%p82) target = $region25
    $region24: #{tpu_custom_call.1} parent=1 // pred_region
      %v85 = vld [vmem:[#allocation2] sm:$0xff]
      %v86 = vld [vmem:[#allocation2 + $0x8] sm:$0xff]
      %v87 = vadd.f32 %v85, %v86
      %88 = vadd.xlane.f32.xlu0 %v87
      %v89 = vpop.xlane.xlu0 %88
      %v90 = vrot.slane %v89, 4
      %v91 = vadd.f32 %v89, %v90
      %v92 = vrot.slane %v91, 2
      %v93 = vadd.f32 %v91, %v92
      %v94 = vrot.slane %v93, 1
      %v95 = vadd.f32 %v93, %v94
      %s96 = vtos %v95
      %s97 = scalar_lea.smem [#allocation8], 0
      %98 = sst [smem:[%s97]] %s96
    $region25: #{tpu_custom_call.1} parent=1 // pred_fallthru
      _
    // Predicated region
    $region26: #{tpu_custom_call.1} parent=1 // pred_check
      _
    $region27: #{tpu_custom_call.1} parent=1 // pred_check_branch
      %100 = sbr.rel (0) target = $region29
    $region28: #{tpu_custom_call.1} parent=1 // pred_region
      %s102 = ssub.s32 16, 16
      %103 = vsyncadd [#allocation5], %s102
      %106 = dma.smem_to_hbm [#allocation8], 16, %s2, [#allocation5]
    $region29: #{tpu_custom_call.1} parent=1 // pred_fallthru
      _
    // Predicated region
    $region30: #{tpu_custom_call.1} parent=1 // pred_check
      _
    $region31: #{tpu_custom_call.1} parent=1 // pred_check_branch
      %108 = sbr.rel (0) target = $region33
    $region32: #{tpu_custom_call.1} parent=1 // pred_region
      %109 = dma.done [#allocation5], 16
    $region33: #{tpu_custom_call.1} parent=1 // pred_fallthru
      _
    %110 = sfence
    %111 = vsyncpa [#allocation4], 1
    %112 = vsyncpa [#allocation7], 1
    %113 = vsyncpa [#allocation5], 1

</llo_original>
